<compile_context>
chip_gen: v5e
topology: v5e:2x2
jax: 0.10.0
libtpu: 0.0.40
codegen_flags: <defaults>
</compile_context>

<pallas_src>
import functools

import jax
import jax.numpy as jnp
from jax.experimental import pallas as pl
from jax.experimental.pallas import tpu as pltpu

F_PAD = 128      # lane-padded feature width for every layer (num_state/50/64/num_action -> 128)
N_LAYERS = 4


def mlp_kernel(x_ref, w_ref, b_ref, o_ref):
    x = x_ref[...]                      # (TB, 128) compute dtype (bf16 or f32)
    b = b_ref[...]                      # (8, 128) f32; rows 0..3 hold b1..b4

    h = jnp.dot(x, w_ref[0], preferred_element_type=jnp.float32) + b[0:1, :]
    h = jnp.maximum(h, 0.0).astype(x.dtype)
    h = jnp.dot(h, w_ref[1], preferred_element_type=jnp.float32) + b[1:2, :]
    h = jnp.maximum(h, 0.0).astype(x.dtype)
    h = jnp.dot(h, w_ref[2], preferred_element_type=jnp.float32) + b[2:3, :]
    h = jnp.maximum(h, 0.0).astype(x.dtype)
    out = jnp.dot(h, w_ref[3], preferred_element_type=jnp.float32) + b[3:4, :]
    o_ref[...] = out.astype(o_ref.dtype)   # lane-dense (TB, 128) store


def pack_params(params, compute_dtype=jnp.bfloat16):
    """Pack [(W,b)] * 4 into one padded weight slab + one padded bias slab.

    Zero padding keeps the math exact: padded input lanes are 0 and padded
    weight rows/cols are 0, so every padded contribution is exactly 0.
    """
    w_slab = jnp.zeros((N_LAYERS, F_PAD, F_PAD), compute_dtype)
    b_slab = jnp.zeros((8, F_PAD), jnp.float32)          # 8 rows: sublane aligned
    for l, (w, b) in enumerate(params):
        fin, fout = w.shape
        w_slab = w_slab.at[l, :fin, :fout].set(w.astype(compute_dtype))
        b_slab = b_slab.at[l, :fout].set(b.reshape(-1).astype(jnp.float32))
    return w_slab, b_slab


def _round_up(x, m):
    return (x + m - 1) // m * m


@functools.partial(jax.jit, static_argnames=("num_action",))
def network_forward(x, w_slab, b_slab, *, num_action):
    """x: (B, num_state) f32. w_slab: (4,128,128). b_slab: (8,128) f32.
    Returns (B, num_action) f32."""
    B, num_state = x.shape
    compute_dtype = w_slab.dtype

    # Batch tile: multiple of 8 sublanes; capped at 512 rows so double-buffered
    # tiles stay far inside v5e's 16 MiB scoped-VMEM default.
    if B <= 512:
        tb = _round_up(B, 8)
        b_pad = tb
    else:
        tb = 512
        b_pad = _round_up(B, tb)

    x_p = jnp.zeros((b_pad, F_PAD), compute_dtype)
    x_p = x_p.at[:B, :num_state].set(x.astype(compute_dtype))

    n_blocks = b_pad // tb

    out_p = pl.pallas_call(
        mlp_kernel,
        out_shape=jax.ShapeDtypeStruct((b_pad, F_PAD), jnp.float32),
        grid=(n_blocks,),
        in_specs=[
            pl.BlockSpec((tb, F_PAD), lambda i: (i, 0)),                  # x tile
            pl.BlockSpec((N_LAYERS, F_PAD, F_PAD), lambda i: (0, 0, 0)),  # weights (resident)
            pl.BlockSpec((8, F_PAD), lambda i: (0, 0)),                   # biases (resident)
        ],
        out_specs=pl.BlockSpec((tb, F_PAD), lambda i: (i, 0)),            # lane-dense output
        compiler_params=pltpu.CompilerParams(
            dimension_semantics=("parallel",)),                           # 2 TCs on v7x
    )(x_p, w_slab, b_slab)

    return out_p[:B, :num_action]


def init_params(key, num_state, num_action):
    """Deterministic init matching nn.Linear shapes (stored as (in, out))."""
    dims = [(num_state, 50), (50, 64), (64, 64), (64, num_action)]
    params = []
    for (fan_in, fan_out) in dims:
        key, kw, kb = jax.random.split(key, 3)
        bound = 1.0 / jnp.sqrt(fan_in)  # PyTorch default U(-1/sqrt(in), 1/sqrt(in))
        w = jax.random.uniform(kw, (fan_in, fan_out), jnp.float32, -bound, bound)
        b = jax.random.uniform(kb, (1, fan_out), jnp.float32, -bound, bound)
        params.append((w, b))
    return params


def reference_forward(x, params):
    h = x
    for i, (w, b) in enumerate(params):
        h = h @ w + b
        if i < len(params) - 1:
            h = jnp.maximum(h, 0.0)
    return h


if __name__ == "__main__":
    # LunarLander-v2: num_state = 8, num_action = 4
    num_state, num_action = 8, 4
    batch = 8

    key = jax.random.PRNGKey(0)
    key, kx = jax.random.split(key)
    x = jax.random.normal(kx, (batch, num_state), jnp.float32)
    params = init_params(key, num_state, num_action)

    ref = reference_forward(x, params)

    # f32 operand path: matches the reference tightly.
    w32, b32 = pack_params(params, jnp.float32)
    out_f32 = jax.block_until_ready(
        network_forward(x, w32, b32, num_action=num_action))
    assert out_f32.shape == (batch, num_action)
    assert jnp.allclose(out_f32, ref, atol=2e-3, rtol=2e-3)

    # bf16 operand path (native MXU cadence on v6e/v7x, f32 accumulation).
    wbf, bbf = pack_params(params, jnp.bfloat16)
    out_bf16 = jax.block_until_ready(
        network_forward(x, wbf, bbf, num_action=num_action))
    assert out_bf16.shape == (batch, num_action)
    assert jnp.allclose(out_bf16, ref, atol=5e-2, rtol=5e-2)

    print("KERNEL_OK")
</pallas_src>

<mosaic_0001>
module attributes {stable_mosaic.version = 11 : i64} {
  func.func @mlp_kernel(%arg0: i32, %arg1: memref<8x128xf32, #tpu.memory_space<vmem>>, %arg2: memref<4x128x128xf32, #tpu.memory_space<vmem>>, %arg3: memref<8x128xf32, #tpu.memory_space<vmem>>, %arg4: memref<8x128xf32, #tpu.memory_space<vmem>>) attributes {dimension_semantics = [#tpu.dimension_semantics<parallel>], iteration_bounds = array<i64: 1>, scalar_prefetch = 0 : i64, scratch_operands = 0 : i64, tpu.core_type = #tpu.core_type<tc>, window_params = [{transform_indices = @transform_0, window_bounds = array<i64: 8, 128>}, {pipeline_mode = #tpu.pipeline_mode<synchronous>, transform_indices = @transform_1, window_bounds = array<i64: 4, 128, 128>}, {pipeline_mode = #tpu.pipeline_mode<synchronous>, transform_indices = @transform_2, window_bounds = array<i64: 8, 128>}, {transform_indices = @transform_3, window_bounds = array<i64: 8, 128>}]} {
    %c0 = arith.constant 0 : index
    %c0_0 = arith.constant 0 : index
    %0 = vector.load %arg1[%c0, %c0_0] : memref<8x128xf32, #tpu.memory_space<vmem>>, vector<8x128xf32>
    %c0_1 = arith.constant 0 : index
    %c0_2 = arith.constant 0 : index
    %1 = vector.load %arg3[%c0_1, %c0_2] : memref<8x128xf32, #tpu.memory_space<vmem>>, vector<8x128xf32>
    %c0_3 = arith.constant 0 : index
    %c0_4 = arith.constant 0 : index
    %c0_5 = arith.constant 0 : index
    %2 = vector.load %arg2[%c0_3, %c0_4, %c0_5] : memref<4x128x128xf32, #tpu.memory_space<vmem>>, vector<1x128x128xf32>
    %3 = vector.shape_cast %2 : vector<1x128x128xf32> to vector<128x128xf32>
    %cst = arith.constant dense<0.000000e+00> : vector<8x128xf32>
    %4 = tpu.matmul %0, %3, %cst {dimension_numbers = #tpu.dot_dimension_numbers<[1], [0], [0], [1], [0, 0, 1, 1], [], []>} : vector<8x128xf32>, vector<128x128xf32>, vector<8x128xf32> -> vector<8x128xf32>
    %5 = vector.extract_strided_slice %1 {offsets = [0, 0], sizes = [1, 128], strides = [1, 1]} : vector<8x128xf32> to vector<1x128xf32>
    %6 = vector.broadcast %5 : vector<1x128xf32> to vector<8x128xf32>
    %7 = arith.addf %4, %6 : vector<8x128xf32>
    %cst_6 = arith.constant 0.000000e+00 : f32
    %8 = vector.broadcast %cst_6 : f32 to vector<8x128xf32>
    %9 = arith.maximumf %7, %8 : vector<8x128xf32>
    %c1 = arith.constant 1 : index
    %c0_7 = arith.constant 0 : index
    %c0_8 = arith.constant 0 : index
    %10 = vector.load %arg2[%c1, %c0_7, %c0_8] : memref<4x128x128xf32, #tpu.memory_space<vmem>>, vector<1x128x128xf32>
    %11 = vector.shape_cast %10 : vector<1x128x128xf32> to vector<128x128xf32>
    %cst_9 = arith.constant dense<0.000000e+00> : vector<8x128xf32>
    %12 = tpu.matmul %9, %11, %cst_9 {dimension_numbers = #tpu.dot_dimension_numbers<[1], [0], [0], [1], [0, 0, 1, 1], [], []>} : vector<8x128xf32>, vector<128x128xf32>, vector<8x128xf32> -> vector<8x128xf32>
    %13 = vector.extract_strided_slice %1 {offsets = [1, 0], sizes = [1, 128], strides = [1, 1]} : vector<8x128xf32> to vector<1x128xf32>
    %14 = vector.broadcast %13 : vector<1x128xf32> to vector<8x128xf32>
    %15 = arith.addf %12, %14 : vector<8x128xf32>
    %cst_10 = arith.constant 0.000000e+00 : f32
    %16 = vector.broadcast %cst_10 : f32 to vector<8x128xf32>
    %17 = arith.maximumf %15, %16 : vector<8x128xf32>
    %c2 = arith.constant 2 : index
    %c0_11 = arith.constant 0 : index
    %c0_12 = arith.constant 0 : index
    %18 = vector.load %arg2[%c2, %c0_11, %c0_12] : memref<4x128x128xf32, #tpu.memory_space<vmem>>, vector<1x128x128xf32>
    %19 = vector.shape_cast %18 : vector<1x128x128xf32> to vector<128x128xf32>
    %cst_13 = arith.constant dense<0.000000e+00> : vector<8x128xf32>
    %20 = tpu.matmul %17, %19, %cst_13 {dimension_numbers = #tpu.dot_dimension_numbers<[1], [0], [0], [1], [0, 0, 1, 1], [], []>} : vector<8x128xf32>, vector<128x128xf32>, vector<8x128xf32> -> vector<8x128xf32>
    %21 = vector.extract_strided_slice %1 {offsets = [2, 0], sizes = [1, 128], strides = [1, 1]} : vector<8x128xf32> to vector<1x128xf32>
    %22 = vector.broadcast %21 : vector<1x128xf32> to vector<8x128xf32>
    %23 = arith.addf %20, %22 : vector<8x128xf32>
    %cst_14 = arith.constant 0.000000e+00 : f32
    %24 = vector.broadcast %cst_14 : f32 to vector<8x128xf32>
    %25 = arith.maximumf %23, %24 : vector<8x128xf32>
    %c3 = arith.constant 3 : index
    %c0_15 = arith.constant 0 : index
    %c0_16 = arith.constant 0 : index
    %26 = vector.load %arg2[%c3, %c0_15, %c0_16] : memref<4x128x128xf32, #tpu.memory_space<vmem>>, vector<1x128x128xf32>
    %27 = vector.shape_cast %26 : vector<1x128x128xf32> to vector<128x128xf32>
    %cst_17 = arith.constant dense<0.000000e+00> : vector<8x128xf32>
    %28 = tpu.matmul %25, %27, %cst_17 {dimension_numbers = #tpu.dot_dimension_numbers<[1], [0], [0], [1], [0, 0, 1, 1], [], []>} : vector<8x128xf32>, vector<128x128xf32>, vector<8x128xf32> -> vector<8x128xf32>
    %29 = vector.extract_strided_slice %1 {offsets = [3, 0], sizes = [1, 128], strides = [1, 1]} : vector<8x128xf32> to vector<1x128xf32>
    %30 = vector.broadcast %29 : vector<1x128xf32> to vector<8x128xf32>
    %31 = arith.addf %28, %30 : vector<8x128xf32>
    %c0_18 = arith.constant 0 : index
    %c0_19 = arith.constant 0 : index
    %32 = vector.load %arg4[%c0_18, %c0_19] : memref<8x128xf32, #tpu.memory_space<vmem>>, vector<8x128xf32>
    tpu.vector_store %arg4[%c0_18, %c0_19], %31 {strides = array<i32>} : memref<8x128xf32, #tpu.memory_space<vmem>>, vector<8x128xf32>,
    return
  }
  func.func @transform_0(%arg0: i32) -> (i32, i32) {
    %c0_i32 = arith.constant 0 : i32
    %c0_i32_0 = arith.constant 0 : i32
    return %arg0, %c0_i32 : i32, i32
  }
  func.func @transform_1(%arg0: i32) -> (i32, i32, i32) {
    %c0_i32 = arith.constant 0 : i32
    %c0_i32_0 = arith.constant 0 : i32
    %c0_i32_1 = arith.constant 0 : i32
    %c0_i32_2 = arith.constant 0 : i32
    return %c0_i32, %c0_i32_0, %c0_i32_1 : i32, i32, i32
  }
  func.func @transform_2(%arg0: i32) -> (i32, i32) {
    %c0_i32 = arith.constant 0 : i32
    %c0_i32_0 = arith.constant 0 : i32
    %c0_i32_1 = arith.constant 0 : i32
    return %c0_i32, %c0_i32_0 : i32, i32
  }
  func.func @transform_3(%arg0: i32) -> (i32, i32) {
    %c0_i32 = arith.constant 0 : i32
    %c0_i32_0 = arith.constant 0 : i32
    return %arg0, %c0_i32 : i32, i32
  }
}

</mosaic_0001>

<llo_original>
// kernel: network_forward.1
$region0: #{network_forward.1}
  #allocation0 [shape = 'u32[]', space=smem, size = 0x4, offset = 0x4, fixed_abs, tag = 'smem constant byte address 0x4 - core index']
  #allocation1 [shape = 'u32[72,128]{1,0:T(1,128)}', space=vmem, size = 0x9000, scoped, tag = 'internal scratch']
  %s0 = inlined_call_operand.vmem [shape: f32[8,128], index: 0, kind: input, shape index: {}]
  %s1 = inlined_call_operand.hbm [shape: f32[4,128,128], index: 1, kind: input, shape index: {}]
  %s2 = inlined_call_operand.vmem [shape: f32[8,128], index: 2, kind: input, shape index: {}]
  %s3 = inlined_call_operand.vmem [shape: f32[8,128], index: 3, kind: output, shape index: {}]
  %s4 = sld [smem:[#allocation0]]
  $region26: #{network_forward.1} parent=0
    _
  %s6 = ssub.s32 1, %s4
  %s7 = scalar_select 0, %s6, %s4
  $region1: #{network_forward.1} parent=0
    #allocation2 [shape = 'u8[262144]{0}', space=vmem, size = 0x40000, scoped, tag = 'input window, operand 1, single buffered']
    #allocation3 [shape = 's32[1]{0}', space=sflag, size = 0x4, scoped, tag = 'scoped memory for network_forward.1']
    %8 = vsyncpa [#allocation3], 0
    // Predicated region
    $region2: #{network_forward.1} parent=1 // pred_check
      _
    $region3: #{network_forward.1} parent=1 // pred_check_branch
      %10 = sbr.rel (0) target = $region5
    $region4: #{network_forward.1} parent=1 // pred_region
      _
    $region5: #{network_forward.1} parent=1 // pred_fallthru
      _
    // Predicated region
    $region6: #{network_forward.1} parent=1 // pred_check
      _
    $region7: #{network_forward.1} parent=1 // pred_check_branch
      %12 = sbr.rel (0) target = $region9
    $region8: #{network_forward.1} parent=1 // pred_region
      %14 = vsyncadd [#allocation3], 0
      %s15 = sshll.u32 %s1, 4
      %s16 = int_to_ptr.hbm [resolvable:$true] %s15
      %s17 = sshll.u32 [#allocation2], 4
      %s18 = int_to_ptr.vmem [resolvable:$true] %s17
      %23 = dma.hbm_to_vmem [thread:$0]  %s16, 8192, %s18, [#allocation3], 128, 128, 8
    $region9: #{network_forward.1} parent=1 // pred_fallthru
      _
    // Predicated region
    $region10: #{network_forward.1} parent=1 // pred_check
      _
    $region11: #{network_forward.1} parent=1 // pred_check_branch
      %25 = sbr.rel (0) target = $region13
    $region12: #{network_forward.1} parent=1 // pred_region
      _
    $region13: #{network_forward.1} parent=1 // pred_fallthru
      _
    // Predicated region
    $region14: #{network_forward.1} parent=1 // pred_check
      _
    $region15: #{network_forward.1} parent=1 // pred_check_branch
      %27 = sbr.rel (0) target = $region17
    $region16: #{network_forward.1} parent=1 // pred_region
      %29 = dma.done [#allocation3], 8192
    $region17: #{network_forward.1} parent=1 // pred_fallthru
      _
    %v30 = vld [vmem:[%s0] sm:$0xff]
    %v31 = vld [vmem:[%s2] sm:$0xff]
    %v32 = vld [vmem:[#allocation2] sm:$0xff]
    %v33 = vld [vmem:[#allocation2 + $0x8] sm:$0xff]
    %v34 = vld [vmem:[#allocation2 + $0x10] sm:$0xff]
    %v35 = vld [vmem:[#allocation2 + $0x18] sm:$0xff]
    %v36 = vld [vmem:[#allocation2 + $0x20] sm:$0xff]
    %v37 = vld [vmem:[#allocation2 + $0x28] sm:$0xff]
    %v38 = vld [vmem:[#allocation2 + $0x30] sm:$0xff]
    %v39 = vld [vmem:[#allocation2 + $0x38] sm:$0xff]
    %v40 = vld [vmem:[#allocation2 + $0x40] sm:$0xff]
    %v41 = vld [vmem:[#allocation2 + $0x48] sm:$0xff]
    %v42 = vld [vmem:[#allocation2 + $0x50] sm:$0xff]
    %v43 = vld [vmem:[#allocation2 + $0x58] sm:$0xff]
    %v44 = vld [vmem:[#allocation2 + $0x60] sm:$0xff]
    %v45 = vld [vmem:[#allocation2 + $0x68] sm:$0xff]
    %v46 = vld [vmem:[#allocation2 + $0x70] sm:$0xff]
    %v47 = vld [vmem:[#allocation2 + $0x78] sm:$0xff]
    %v48 = vperm.slane %v31, 0
    %49 = vmatpush.msra.mxu0 %v47
    %50 = vmatpush.msra.mxu0 %v46
    %51 = vmatpush.msra.mxu0 %v45
    %52 = vmatpush.msra.mxu0 %v44
    %53 = vmatpush.msra.mxu0 %v43
    %54 = vmatpush.msra.mxu0 %v42
    %55 = vmatpush.msra.mxu0 %v41
    %56 = vmatpush.msra.mxu0 %v40
    %57 = vmatpush.msra.mxu0 %v39
    %58 = vmatpush.msra.mxu0 %v38
    %59 = vmatpush.msra.mxu0 %v37
    %60 = vmatpush.msra.mxu0 %v36
    %61 = vmatpush.msra.mxu0 %v35
    %62 = vmatpush.msra.mxu0 %v34
    %63 = vmatpush.msra.mxu0 %v33
    %64 = vmatpush.msra.mxu0 %v32
    %65 = vmatmul.f32.gmra.mxu0 %v30
    %v66 = vpop.f32.mrf.mxu0
    %v67 = vadd.f32 %v48, %v66
    %68 = vdwg.mxu0
    %v69 = vmax.f32 %v67, 0.0
    %s70 = scalar_lea.vmem [#allocation2], 128
    %v71 = vld [vmem:[%s70] sm:$0xff]
    %v72 = vld [vmem:[%s70 + $0x8] sm:$0xff]
    %v73 = vld [vmem:[%s70 + $0x10] sm:$0xff]
    %v74 = vld [vmem:[%s70 + $0x18] sm:$0xff]
    %v75 = vld [vmem:[%s70 + $0x20] sm:$0xff]
    %v76 = vld [vmem:[%s70 + $0x28] sm:$0xff]
    %v77 = vld [vmem:[%s70 + $0x30] sm:$0xff]
    %v78 = vld [vmem:[%s70 + $0x38] sm:$0xff]
    %v79 = vld [vmem:[%s70 + $0x40] sm:$0xff]
    %v80 = vld [vmem:[%s70 + $0x48] sm:$0xff]
    %v81 = vld [vmem:[%s70 + $0x50] sm:$0xff]
    %v82 = vld [vmem:[%s70 + $0x58] sm:$0xff]
    %v83 = vld [vmem:[%s70 + $0x60] sm:$0xff]
    %v84 = vld [vmem:[%s70 + $0x68] sm:$0xff]
    %v85 = vld [vmem:[%s70 + $0x70] sm:$0xff]
    %v86 = vld [vmem:[%s70 + $0x78] sm:$0xff]
    %v87 = vperm.slane %v31, 1
    %88 = vmatpush.msra.mxu0 %v86
    %89 = vmatpush.msra.mxu0 %v85
    %90 = vmatpush.msra.mxu0 %v84
    %91 = vmatpush.msra.mxu0 %v83
    %92 = vmatpush.msra.mxu0 %v82
    %93 = vmatpush.msra.mxu0 %v81
    %94 = vmatpush.msra.mxu0 %v80
    %95 = vmatpush.msra.mxu0 %v79
    %96 = vmatpush.msra.mxu0 %v78
    %97 = vmatpush.msra.mxu0 %v77
    %98 = vmatpush.msra.mxu0 %v76
    %99 = vmatpush.msra.mxu0 %v75
    %100 = vmatpush.msra.mxu0 %v74
    %101 = vmatpush.msra.mxu0 %v73
    %102 = vmatpush.msra.mxu0 %v72
    %103 = vmatpush.msra.mxu0 %v71
    %104 = vmatmul.f32.gmra.mxu0 %v69
    %v105 = vpop.f32.mrf.mxu0
    %v106 = vadd.f32 %v87, %v105
    %107 = vdwg.mxu0
    %v108 = vmax.f32 %v106, 0.0
    %s109 = scalar_lea.vmem [#allocation2], 256
    %v110 = vld [vmem:[%s109] sm:$0xff]
    %v111 = vld [vmem:[%s109 + $0x8] sm:$0xff]
    %v112 = vld [vmem:[%s109 + $0x10] sm:$0xff]
    %v113 = vld [vmem:[%s109 + $0x18] sm:$0xff]
    %v114 = vld [vmem:[%s109 + $0x20] sm:$0xff]
    %v115 = vld [vmem:[%s109 + $0x28] sm:$0xff]
    %v116 = vld [vmem:[%s109 + $0x30] sm:$0xff]
    %v117 = vld [vmem:[%s109 + $0x38] sm:$0xff]
    %v118 = vld [vmem:[%s109 + $0x40] sm:$0xff]
    %v119 = vld [vmem:[%s109 + $0x48] sm:$0xff]
    %v120 = vld [vmem:[%s109 + $0x50] sm:$0xff]
    %v121 = vld [vmem:[%s109 + $0x58] sm:$0xff]
    %v122 = vld [vmem:[%s109 + $0x60] sm:$0xff]
    %v123 = vld [vmem:[%s109 + $0x68] sm:$0xff]
    %v124 = vld [vmem:[%s109 + $0x70] sm:$0xff]
    %v125 = vld [vmem:[%s109 + $0x78] sm:$0xff]
    %v126 = vperm.slane %v31, 2
    %127 = vmatpush.msra.mxu0 %v125
    %128 = vmatpush.msra.mxu0 %v124
    %129 = vmatpush.msra.mxu0 %v123
    %130 = vmatpush.msra.mxu0 %v122
    %131 = vmatpush.msra.mxu0 %v121
    %132 = vmatpush.msra.mxu0 %v120
    %133 = vmatpush.msra.mxu0 %v119
    %134 = vmatpush.msra.mxu0 %v118
    %135 = vmatpush.msra.mxu0 %v117
    %136 = vmatpush.msra.mxu0 %v116
    %137 = vmatpush.msra.mxu0 %v115
    %138 = vmatpush.msra.mxu0 %v114
    %139 = vmatpush.msra.mxu0 %v113
    %140 = vmatpush.msra.mxu0 %v112
    %141 = vmatpush.msra.mxu0 %v111
    %142 = vmatpush.msra.mxu0 %v110
    %143 = vmatmul.f32.gmra.mxu0 %v108
    %v144 = vpop.f32.mrf.mxu0
    %v145 = vadd.f32 %v126, %v144
    %146 = vdwg.mxu0
    %v147 = vmax.f32 %v145, 0.0
    %s148 = scalar_lea.vmem [#allocation2], 384
    %v149 = vld [vmem:[%s148] sm:$0xff]
    %v150 = vld [vmem:[%s148 + $0x8] sm:$0xff]
    %v151 = vld [vmem:[%s148 + $0x10] sm:$0xff]
    %v152 = vld [vmem:[%s148 + $0x18] sm:$0xff]
    %v153 = vld [vmem:[%s148 + $0x20] sm:$0xff]
    %v154 = vld [vmem:[%s148 + $0x28] sm:$0xff]
    %v155 = vld [vmem:[%s148 + $0x30] sm:$0xff]
    %v156 = vld [vmem:[%s148 + $0x38] sm:$0xff]
    %v157 = vld [vmem:[%s148 + $0x40] sm:$0xff]
    %v158 = vld [vmem:[%s148 + $0x48] sm:$0xff]
    %v159 = vld [vmem:[%s148 + $0x50] sm:$0xff]
    %v160 = vld [vmem:[%s148 + $0x58] sm:$0xff]
    %v161 = vld [vmem:[%s148 + $0x60] sm:$0xff]
    %v162 = vld [vmem:[%s148 + $0x68] sm:$0xff]
    %v163 = vld [vmem:[%s148 + $0x70] sm:$0xff]
    %v164 = vld [vmem:[%s148 + $0x78] sm:$0xff]
    %v165 = vperm.slane %v31, 3
    %166 = vmatpush.msra.mxu0 %v164
    %167 = vmatpush.msra.mxu0 %v163
    %168 = vmatpush.msra.mxu0 %v162
    %169 = vmatpush.msra.mxu0 %v161
    %170 = vmatpush.msra.mxu0 %v160
    %171 = vmatpush.msra.mxu0 %v159
    %172 = vmatpush.msra.mxu0 %v158
    %173 = vmatpush.msra.mxu0 %v157
    %174 = vmatpush.msra.mxu0 %v156
    %175 = vmatpush.msra.mxu0 %v155
    %176 = vmatpush.msra.mxu0 %v154
    %177 = vmatpush.msra.mxu0 %v153
    %178 = vmatpush.msra.mxu0 %v152
    %179 = vmatpush.msra.mxu0 %v151
    %180 = vmatpush.msra.mxu0 %v150
    %181 = vmatpush.msra.mxu0 %v149
    %182 = vmatmul.f32.gmra.mxu0 %v147
    %v183 = vpop.f32.mrf.mxu0
    %v184 = vadd.f32 %v165, %v183
    %185 = vdwg.mxu0
    %186 = vst [vmem:[%s3] sm:$0xff] %v184
    // Predicated region
    $region18: #{network_forward.1} parent=1 // pred_check
      _
    $region19: #{network_forward.1} parent=1 // pred_check_branch
      %188 = sbr.rel (0) target = $region21
    $region20: #{network_forward.1} parent=1 // pred_region
      _
    $region21: #{network_forward.1} parent=1 // pred_fallthru
      _
    // Predicated region
    $region22: #{network_forward.1} parent=1 // pred_check
      _
    $region23: #{network_forward.1} parent=1 // pred_check_branch
      %190 = sbr.rel (0) target = $region25
    $region24: #{network_forward.1} parent=1 // pred_region
      _
    $region25: #{network_forward.1} parent=1 // pred_fallthru
      _
    %191 = vsyncpa [#allocation3], 1

</llo_original>
